<compile_context>
chip_gen: v5e
topology: v5e:2x2
jax: 0.10.0
libtpu: 0.0.40
codegen_flags: <defaults>
</compile_context>

<pallas_src>
import jax
import jax.numpy as jnp
import numpy as np
from jax.experimental import pallas as pl
from jax.experimental.pallas import tpu as pltpu


def _trend_kernel(z_ref, w1_ref, b1_ref, w2_ref, b2_ref, out_ref):
    # z:   (B, L)       latent codes
    # w1:  (L, Hp)      first linear weight (transposed, zero-padded cols)
    # b1:  (1, Hp)      first linear bias   (zero-padded)
    # w2:  (Hp, Np)     folded (Linear2 x poly basis) effective weight
    # b2:  (1, Np)      folded effective bias
    # out: (B, Np)      lane-dense flat output (t*D + d layout)
    z = z_ref[...]
    h = jnp.dot(z, w1_ref[...], preferred_element_type=jnp.float32) + b1_ref[...]
    h = jnp.where(h > 0, h, jnp.float32(0.01) * h)   # LeakyReLU(0.01)
    out = jnp.dot(h, w2_ref[...], preferred_element_type=jnp.float32) + b2_ref[...]
    out_ref[...] = out.astype(out_ref.dtype)


def _pad_to(n, m=128):
    return ((n + m - 1) // m) * m


def trend_block_forward(z, w1_t, b1, w2_t, b2, n_lags, input_dim, trend_poly):
    """z: (B, latent_dim); w1_t: (latent_dim, D*P); b1: (D*P,);
    w2_t: (D*P, D*P); b2: (D*P,). Returns (B, n_lags, input_dim)."""
    B, L = z.shape
    D, P, T = input_dim, trend_poly, n_lags
    H = D * P
    assert w1_t.shape == (L, H) and w2_t.shape == (H, H)

    # Polynomial trend basis (trace-time constant).
    lin_space = jnp.arange(T, dtype=jnp.float32) / T                  # (T,)
    poly = jnp.stack([lin_space ** (p + 1) for p in range(P)], axis=0)  # (P, T)

    # Fold Linear2 + basis contraction into one effective weight / bias:
    #   out[b, t*D + d] = sum_k h[b, k] * W2_eff[k, t*D+d] + b_eff[t*D+d]
    w2_eff = jnp.einsum(
        "kdp,pt->ktd",
        w2_t.reshape(H, D, P).astype(jnp.float32), poly,
    ).reshape(H, T * D)
    b_eff = jnp.einsum(
        "dp,pt->td",
        b2.reshape(D, P).astype(jnp.float32), poly,
    ).reshape(1, T * D)

    # Zero-pad lane dims to multiples of 128 (lane-dense, unmasked stores).
    # LeakyReLU(0) = 0, so padded hidden columns stay zero and cannot leak.
    Hp = _pad_to(H)
    Np = _pad_to(T * D)
    w1_p = jnp.zeros((L, Hp), jnp.float32).at[:, :H].set(w1_t.astype(jnp.float32))
    b1_p = jnp.zeros((1, Hp), jnp.float32).at[:, :H].set(b1.astype(jnp.float32))
    w2_p = jnp.zeros((Hp, Np), jnp.float32).at[:H, :T * D].set(w2_eff)
    b2_p = jnp.zeros((1, Np), jnp.float32).at[:, :T * D].set(b_eff)

    out_flat = pl.pallas_call(
        _trend_kernel,
        out_shape=jax.ShapeDtypeStruct((B, Np), jnp.float32),
        in_specs=[
            pl.BlockSpec(memory_space=pltpu.MemorySpace.VMEM),  # z
            pl.BlockSpec(memory_space=pltpu.MemorySpace.VMEM),  # w1_p
            pl.BlockSpec(memory_space=pltpu.MemorySpace.VMEM),  # b1_p
            pl.BlockSpec(memory_space=pltpu.MemorySpace.VMEM),  # w2_eff (padded)
            pl.BlockSpec(memory_space=pltpu.MemorySpace.VMEM),  # b_eff  (padded)
        ],
        out_specs=pl.BlockSpec(memory_space=pltpu.MemorySpace.VMEM),
    )(z.astype(jnp.float32), w1_p, b1_p, w2_p, b2_p)

    # Wrapper-side layout plumbing: (B, Np) -> (B, T, D).
    return out_flat[:, :T * D].reshape(B, T, D)


def _reference_forward(z, w1_t, b1, w2_t, b2, n_lags, input_dim, trend_poly):
    """Pure-JAX reference mirroring the PyTorch module exactly."""
    B = z.shape[0]
    D, P, T = input_dim, trend_poly, n_lags
    h = z @ w1_t + b1
    h = jnp.where(h > 0, h, 0.01 * h)                      # nn.LeakyReLU()
    trend_params = (h @ w2_t + b2).reshape(B, D, P)
    lin_space = jnp.arange(T, dtype=jnp.float32) / T
    poly = jnp.stack([lin_space ** (p + 1) for p in range(P)], axis=0)  # (P, T)
    trend = jnp.einsum("bki,ij->bkj", trend_params, poly)  # (B, D, T)
    return jnp.transpose(trend, (0, 2, 1))                 # (B, T, D)


if __name__ == "__main__":
    # Small shapes consistent with the module.
    B = 2
    latent_dim = 8
    input_dim = 4
    n_lags = 16
    trend_poly = 2
    H = input_dim * trend_poly

    key = jax.random.PRNGKey(0)
    kz, kw1, kb1, kw2, kb2 = jax.random.split(key, 5)

    z = jax.random.normal(kz, (B, latent_dim), dtype=jnp.float32)

    # nn.Linear(latent_dim, H): weight (out, in) ~ U(-1/sqrt(in), 1/sqrt(in)).
    # Stored transposed (in, out) for the kernel's z @ W layout.
    bound1 = 1.0 / np.sqrt(latent_dim)
    w1_t = jax.random.uniform(kw1, (latent_dim, H), minval=-bound1,
                              maxval=bound1, dtype=jnp.float32)
    b1 = jax.random.uniform(kb1, (H,), minval=-bound1, maxval=bound1,
                            dtype=jnp.float32)
    # nn.Linear(H, H)
    bound2 = 1.0 / np.sqrt(H)
    w2_t = jax.random.uniform(kw2, (H, H), minval=-bound2, maxval=bound2,
                              dtype=jnp.float32)
    b2 = jax.random.uniform(kb2, (H,), minval=-bound2, maxval=bound2,
                            dtype=jnp.float32)

    out = trend_block_forward(z, w1_t, b1, w2_t, b2,
                              n_lags, input_dim, trend_poly)
    out = jax.block_until_ready(out)

    ref = _reference_forward(z, w1_t, b1, w2_t, b2,
                             n_lags, input_dim, trend_poly)
    assert out.shape == (B, n_lags, input_dim), out.shape
    np.testing.assert_allclose(np.asarray(out), np.asarray(ref),
                               rtol=1e-5, atol=1e-5)
    print("KERNEL_OK")
</pallas_src>

<mosaic_0001>
module attributes {stable_mosaic.version = 11 : i64} {
  func.func @_trend_kernel(%arg0: memref<2x8xf32, #tpu.memory_space<vmem>>, %arg1: memref<8x128xf32, #tpu.memory_space<vmem>>, %arg2: memref<1x128xf32, #tpu.memory_space<vmem>>, %arg3: memref<128x128xf32, #tpu.memory_space<vmem>>, %arg4: memref<1x128xf32, #tpu.memory_space<vmem>>, %arg5: memref<2x128xf32, #tpu.memory_space<vmem>>) attributes {dimension_semantics = [], scalar_prefetch = 0 : i64, scratch_operands = 0 : i64, tpu.core_type = #tpu.core_type<tc>} {
    %c0 = arith.constant 0 : index
    %c0_0 = arith.constant 0 : index
    %0 = vector.load %arg0[%c0, %c0_0] : memref<2x8xf32, #tpu.memory_space<vmem>>, vector<2x8xf32>
    %c0_1 = arith.constant 0 : index
    %c0_2 = arith.constant 0 : index
    %1 = vector.load %arg1[%c0_1, %c0_2] : memref<8x128xf32, #tpu.memory_space<vmem>>, vector<8x128xf32>
    %cst = arith.constant dense<0.000000e+00> : vector<2x128xf32>
    %2 = tpu.matmul %0, %1, %cst {dimension_numbers = #tpu.dot_dimension_numbers<[1], [0], [0], [1], [0, 0, 1, 1], [], []>} : vector<2x8xf32>, vector<8x128xf32>, vector<2x128xf32> -> vector<2x128xf32>
    %c0_3 = arith.constant 0 : index
    %c0_4 = arith.constant 0 : index
    %3 = vector.load %arg2[%c0_3, %c0_4] : memref<1x128xf32, #tpu.memory_space<vmem>>, vector<1x128xf32>
    %4 = vector.broadcast %3 : vector<1x128xf32> to vector<2x128xf32>
    %5 = arith.addf %2, %4 : vector<2x128xf32>
    %cst_5 = arith.constant 0.000000e+00 : f32
    %6 = vector.broadcast %cst_5 : f32 to vector<2x128xf32>
    %7 = arith.cmpf ogt, %5, %6 : vector<2x128xf32>
    %cst_6 = arith.constant 0.00999999977 : f32
    %8 = vector.broadcast %cst_6 : f32 to vector<2x128xf32>
    %9 = arith.mulf %8, %5 : vector<2x128xf32>
    %10 = arith.select %7, %5, %9 : vector<2x128xi1>, vector<2x128xf32>
    %c0_7 = arith.constant 0 : index
    %c0_8 = arith.constant 0 : index
    %11 = vector.load %arg3[%c0_7, %c0_8] : memref<128x128xf32, #tpu.memory_space<vmem>>, vector<128x128xf32>
    %cst_9 = arith.constant dense<0.000000e+00> : vector<2x128xf32>
    %12 = tpu.matmul %10, %11, %cst_9 {dimension_numbers = #tpu.dot_dimension_numbers<[1], [0], [0], [1], [0, 0, 1, 1], [], []>} : vector<2x128xf32>, vector<128x128xf32>, vector<2x128xf32> -> vector<2x128xf32>
    %c0_10 = arith.constant 0 : index
    %c0_11 = arith.constant 0 : index
    %13 = vector.load %arg4[%c0_10, %c0_11] : memref<1x128xf32, #tpu.memory_space<vmem>>, vector<1x128xf32>
    %14 = vector.broadcast %13 : vector<1x128xf32> to vector<2x128xf32>
    %15 = arith.addf %12, %14 : vector<2x128xf32>
    %c0_12 = arith.constant 0 : index
    %c0_13 = arith.constant 0 : index
    %16 = vector.load %arg5[%c0_12, %c0_13] : memref<2x128xf32, #tpu.memory_space<vmem>>, vector<2x128xf32>
    tpu.vector_store %arg5[%c0_12, %c0_13], %15 {strides = array<i32>} : memref<2x128xf32, #tpu.memory_space<vmem>>, vector<2x128xf32>,
    return
  }
}

</mosaic_0001>

<llo_original>
// kernel: tpu_custom_call.1
$region0: #{tpu_custom_call.1}
  #allocation0 [shape = 'u32[]', space=smem, size = 0x4, offset = 0x4, fixed_abs, tag = 'smem constant byte address 0x4 - core index']
  #allocation1 [shape = 'u32[72,128]{1,0:T(1,128)}', space=vmem, size = 0x9000, scoped, tag = 'internal scratch']
  %s0 = inlined_call_operand.hbm [shape: f32[2,8], index: 0, kind: input, shape index: {}]
  %s1 = inlined_call_operand.hbm [shape: f32[8,128], index: 1, kind: input, shape index: {}]
  %s2 = inlined_call_operand.vmem [shape: f32[1,128], index: 2, kind: input, shape index: {}]
  %s3 = inlined_call_operand.hbm [shape: f32[128,128], index: 3, kind: input, shape index: {}]
  %s4 = inlined_call_operand.vmem [shape: f32[1,128], index: 4, kind: input, shape index: {}]
  %s5 = inlined_call_operand.hbm [shape: f32[2,128], index: 5, kind: output, shape index: {}]
  %s6 = sld [smem:[#allocation0]]
  $region42: #{tpu_custom_call.1} parent=0
    _
  %s8 = ssub.s32 1, %s6
  %s9 = scalar_select 0, %s8, %s6
  $region1: #{tpu_custom_call.1} parent=0
    #allocation2 [shape = 'u8[1024]{0}', space=vmem, size = 0x400, scoped, tag = 'input window, operand 0, single buffered']
    #allocation3 [shape = 's32[1]{0}', space=sflag, size = 0x4, scoped, tag = 'scoped memory for tpu_custom_call.1']
    #allocation4 [shape = 's32[1]{0}', space=sflag, size = 0x4, scoped, tag = 'scoped memory for tpu_custom_call.1']
    #allocation5 [shape = 'u8[4096]{0}', space=vmem, size = 0x1000, scoped, tag = 'input window, operand 1, single buffered']
    #allocation6 [shape = 's32[1]{0}', space=sflag, size = 0x4, scoped, tag = 'scoped memory for tpu_custom_call.1']
    #allocation7 [shape = 'u8[65536]{0}', space=vmem, size = 0x10000, scoped, tag = 'input window, operand 3, single buffered']
    #allocation8 [shape = 'u8[1024]{0}', space=vmem, size = 0x400, scoped, tag = 'output window, operand 0, single buffered']
    %10 = vsyncpa [#allocation3], 0
    %11 = vsyncpa [#allocation6], 0
    %12 = vsyncpa [#allocation4], 0
    // Predicated region
    $region2: #{tpu_custom_call.1} parent=1 // pred_check
      _
    $region3: #{tpu_custom_call.1} parent=1 // pred_check_branch
      %14 = sbr.rel (0) target = $region5
    $region4: #{tpu_custom_call.1} parent=1 // pred_region
      %16 = vsyncadd [#allocation3], 0
      %s18 = sshll.u32 %s0, 4
      %s19 = int_to_ptr.hbm [resolvable:$true] %s18
      %s20 = sshll.u32 [#allocation2], 4
      %s21 = int_to_ptr.vmem [resolvable:$true] %s20
      %23 = dma.hbm_to_vmem [thread:$0]  %s19, 32, %s21, [#allocation3]
    $region5: #{tpu_custom_call.1} parent=1 // pred_fallthru
      _
    // Predicated region
    $region6: #{tpu_custom_call.1} parent=1 // pred_check
      _
    $region7: #{tpu_custom_call.1} parent=1 // pred_check_branch
      %25 = sbr.rel (0) target = $region9
    $region8: #{tpu_custom_call.1} parent=1 // pred_region
      %27 = vsyncadd [#allocation6], 0
      %s29 = sshll.u32 %s1, 4
      %s30 = int_to_ptr.hbm [resolvable:$true] %s29
      %s31 = sshll.u32 [#allocation5], 4
      %s32 = int_to_ptr.vmem [resolvable:$true] %s31
      %34 = dma.hbm_to_vmem [thread:$0]  %s30, 128, %s32, [#allocation6]
    $region9: #{tpu_custom_call.1} parent=1 // pred_fallthru
      _
    // Predicated region
    $region10: #{tpu_custom_call.1} parent=1 // pred_check
      _
    $region11: #{tpu_custom_call.1} parent=1 // pred_check_branch
      %36 = sbr.rel (0) target = $region13
    $region12: #{tpu_custom_call.1} parent=1 // pred_region
      _
    $region13: #{tpu_custom_call.1} parent=1 // pred_fallthru
      _
    // Predicated region
    $region14: #{tpu_custom_call.1} parent=1 // pred_check
      _
    $region15: #{tpu_custom_call.1} parent=1 // pred_check_branch
      %38 = sbr.rel (0) target = $region17
    $region16: #{tpu_custom_call.1} parent=1 // pred_region
      %40 = vsyncadd [#allocation6], 0
      %s41 = sshll.u32 %s3, 4
      %s42 = int_to_ptr.hbm [resolvable:$true] %s41
      %s43 = sshll.u32 [#allocation7], 4
      %s44 = int_to_ptr.vmem [resolvable:$true] %s43
      %49 = dma.hbm_to_vmem [thread:$0]  %s42, 2048, %s44, [#allocation6], 128, 128, 8
    $region17: #{tpu_custom_call.1} parent=1 // pred_fallthru
      _
    // Predicated region
    $region18: #{tpu_custom_call.1} parent=1 // pred_check
      _
    $region19: #{tpu_custom_call.1} parent=1 // pred_check_branch
      %51 = sbr.rel (0) target = $region21
    $region20: #{tpu_custom_call.1} parent=1 // pred_region
      _
    $region21: #{tpu_custom_call.1} parent=1 // pred_fallthru
      _
    // Predicated region
    $region22: #{tpu_custom_call.1} parent=1 // pred_check
      _
    $region23: #{tpu_custom_call.1} parent=1 // pred_check_branch
      %53 = sbr.rel (0) target = $region25
    $region24: #{tpu_custom_call.1} parent=1 // pred_region
      %55 = dma.done [#allocation3], 32
    $region25: #{tpu_custom_call.1} parent=1 // pred_fallthru
      _
    // Predicated region
    $region26: #{tpu_custom_call.1} parent=1 // pred_check
      _
    $region27: #{tpu_custom_call.1} parent=1 // pred_check_branch
      %57 = sbr.rel (0) target = $region29
    $region28: #{tpu_custom_call.1} parent=1 // pred_region
      %59 = dma.done [#allocation6], 128
    $region29: #{tpu_custom_call.1} parent=1 // pred_fallthru
      _
    // Predicated region
    $region30: #{tpu_custom_call.1} parent=1 // pred_check
      _
    $region31: #{tpu_custom_call.1} parent=1 // pred_check_branch
      %61 = sbr.rel (0) target = $region33
    $region32: #{tpu_custom_call.1} parent=1 // pred_region
      %63 = dma.done [#allocation6], 2048
    $region33: #{tpu_custom_call.1} parent=1 // pred_fallthru
      _
    %v64 = vld [vmem:[#allocation2] sm:$0x3]
    %v65 = vld [vmem:[#allocation5] sm:$0xff]
    %v66 = vld [vmem:[%s2] sm:$0x1]
    %v68 = vperm.slane %v66, 0
    %vm70 = vcmask 64512
    %v72 = vsel %vm70, %v64, 0
    %74 = vmatpush.msra.mxu0 0.0
    %75 = vmatpush.msra.mxu0 0.0
    %76 = vmatpush.msra.mxu0 0.0
    %77 = vmatpush.msra.mxu0 0.0
    %78 = vmatpush.msra.mxu0 0.0
    %79 = vmatpush.msra.mxu0 0.0
    %80 = vmatpush.msra.mxu0 0.0
    %81 = vmatpush.msra.mxu0 0.0
    %82 = vmatpush.msra.mxu0 0.0
    %83 = vmatpush.msra.mxu0 0.0
    %84 = vmatpush.msra.mxu0 0.0
    %85 = vmatpush.msra.mxu0 0.0
    %86 = vmatpush.msra.mxu0 0.0
    %87 = vmatpush.msra.mxu0 0.0
    %88 = vmatpush.msra.mxu0 0.0
    %89 = vmatpush.msra.mxu0 %v65
    %90 = vmatmul.f32.gmra.mxu0 %v72
    %v91 = vpop.f32.mrf.mxu0
    %v92 = vadd.f32 %v68, %v91
    %93 = vdwg.mxu0
    %vm94 = vcmp.gt.f32.partialorder %v92, 0.0
    %v95 = vmul.f32 %v92, 0.01
    %v96 = vsel %vm94, %v92, %v95
    %v97 = vld [vmem:[#allocation7] sm:$0xff]
    %v98 = vld [vmem:[#allocation7 + $0x8] sm:$0xff]
    %v99 = vld [vmem:[#allocation7 + $0x10] sm:$0xff]
    %v100 = vld [vmem:[#allocation7 + $0x18] sm:$0xff]
    %v101 = vld [vmem:[#allocation7 + $0x20] sm:$0xff]
    %v102 = vld [vmem:[#allocation7 + $0x28] sm:$0xff]
    %v103 = vld [vmem:[#allocation7 + $0x30] sm:$0xff]
    %v104 = vld [vmem:[#allocation7 + $0x38] sm:$0xff]
    %v105 = vld [vmem:[#allocation7 + $0x40] sm:$0xff]
    %v106 = vld [vmem:[#allocation7 + $0x48] sm:$0xff]
    %v107 = vld [vmem:[#allocation7 + $0x50] sm:$0xff]
    %v108 = vld [vmem:[#allocation7 + $0x58] sm:$0xff]
    %v109 = vld [vmem:[#allocation7 + $0x60] sm:$0xff]
    %v110 = vld [vmem:[#allocation7 + $0x68] sm:$0xff]
    %v111 = vld [vmem:[#allocation7 + $0x70] sm:$0xff]
    %v112 = vld [vmem:[#allocation7 + $0x78] sm:$0xff]
    %v113 = vld [vmem:[%s4] sm:$0x1]
    %v115 = vperm.slane %v113, 0
    %117 = vmatpush.msra.mxu0 %v112
    %118 = vmatpush.msra.mxu0 %v111
    %119 = vmatpush.msra.mxu0 %v110
    %120 = vmatpush.msra.mxu0 %v109
    %121 = vmatpush.msra.mxu0 %v108
    %122 = vmatpush.msra.mxu0 %v107
    %123 = vmatpush.msra.mxu0 %v106
    %124 = vmatpush.msra.mxu0 %v105
    %125 = vmatpush.msra.mxu0 %v104
    %126 = vmatpush.msra.mxu0 %v103
    %127 = vmatpush.msra.mxu0 %v102
    %128 = vmatpush.msra.mxu0 %v101
    %129 = vmatpush.msra.mxu0 %v100
    %130 = vmatpush.msra.mxu0 %v99
    %131 = vmatpush.msra.mxu0 %v98
    %132 = vmatpush.msra.mxu0 %v97
    %133 = vmatmul.f32.gmra.mxu0 %v96
    %v134 = vpop.f32.mrf.mxu0
    %v135 = vadd.f32 %v115, %v134
    %136 = vdwg.mxu0
    %137 = vst [vmem:[#allocation8] sm:$0x3] %v135
    // Predicated region
    $region34: #{tpu_custom_call.1} parent=1 // pred_check
      _
    $region35: #{tpu_custom_call.1} parent=1 // pred_check_branch
      %139 = sbr.rel (0) target = $region37
    $region36: #{tpu_custom_call.1} parent=1 // pred_region
      %141 = vsyncadd [#allocation4], 0
      %s143 = sshll.u32 [#allocation8], 4
      %s144 = int_to_ptr.vmem [resolvable:$true] %s143
      %s145 = sshll.u32 %s5, 4
      %s146 = int_to_ptr.hbm [resolvable:$true] %s145
      %148 = dma.vmem_to_hbm [thread:$0]  %s144, 32, %s146, [#allocation4]
    $region37: #{tpu_custom_call.1} parent=1 // pred_fallthru
      _
    // Predicated region
    $region38: #{tpu_custom_call.1} parent=1 // pred_check
      _
    $region39: #{tpu_custom_call.1} parent=1 // pred_check_branch
      %150 = sbr.rel (0) target = $region41
    $region40: #{tpu_custom_call.1} parent=1 // pred_region
      %152 = dma.done [#allocation4], 32
    $region41: #{tpu_custom_call.1} parent=1 // pred_fallthru
      _
    %153 = vsyncpa [#allocation3], 1
    %154 = vsyncpa [#allocation6], 1
    %155 = vsyncpa [#allocation4], 1

</llo_original>
